<compile_context>
chip_gen: v5e
topology: v5e:2x2
jax: 0.10.0
libtpu: 0.0.40
codegen_flags: <defaults>
</compile_context>

<pallas_src>
import functools

import jax
import jax.numpy as jnp
from jax import lax
from jax.experimental import pallas as pl
from jax.experimental.pallas import tpu as pltpu

C_IN = 300   # conv1 in_channels
C1 = 32      # conv1 out_channels
C2 = 64      # conv2 out_channels
CHUNK = 512  # seq rows processed per inner-loop step on the long-S path


def cnn_kernel(x_ref, w1_ref, b1_ref, w2_ref, b2_ref, o_ref, out_scratch, *, chunk):
    """x_ref:       (tile_b, tile_s//4, 4*300) -- each row packs 4 consecutive seq rows
    o_ref:          (tile_b, 64, tile_s//4)    -- channel-major (torch Flatten) layout
    out_scratch:    (n_chunks, 64, chunk//4)   -- staging for lane-dense output stores
    """
    tile_b = x_ref.shape[0]
    rows4 = x_ref.shape[1]            # = tile_s // 4
    q = chunk // 4
    n_chunks = rows4 // q
    mxu_dtype = w1_ref.dtype          # bf16 by default (f32 if caller disables the cast)

    w1 = w1_ref[...]                  # (300, 32) VMEM-resident (constant index_map)
    w2 = w2_ref[...]                  # (32, 64)
    # Hoisted bias broadcasts: done once, reused by every loop iteration.
    b1b = jnp.broadcast_to(b1_ref[...], (q, C1))      # f32
    b2b = jnp.broadcast_to(b2_ref[...], (q, C2))      # f32

    def pooled_block(g, r0):
        # Processes original seq rows [4*r0, 4*r0 + chunk) of batch element g.
        # Stream k = rows congruent to k (mod 4) = static lane slice k of the packed row,
        # so both (2,1) max-pools become plain elementwise maxes.
        def conv1(k):
            xk = x_ref[g, pl.ds(r0, q), pl.ds(k * C_IN, C_IN)].astype(mxu_dtype)
            h = jnp.dot(xk, w1, preferred_element_type=jnp.float32) + b1b
            return jnp.maximum(h, 0.0)                            # (q, 32)

        p1_even = jnp.maximum(conv1(0), conv1(1))                 # pool1, even output rows
        p1_odd = jnp.maximum(conv1(2), conv1(3))                  # pool1, odd output rows

        def conv2(h):
            h2 = jnp.dot(h.astype(mxu_dtype), w2,
                         preferred_element_type=jnp.float32) + b2b
            return jnp.maximum(h2, 0.0)                           # (q, 64)

        out = jnp.maximum(conv2(p1_even), conv2(p1_odd))          # pool2 -> (q, 64)
        return out.T                                              # (64, q) channel-major

    if n_chunks == 1:
        # Small/medium S: the tile groups tile_b batch elements, one whole-S chunk each.
        def body(g, carry):
            o_ref[g, :, :] = pooled_block(g, 0)
            return carry

        lax.fori_loop(0, tile_b, body, 0, unroll=2)
    else:
        # Long S: tile_b == 1. fori_loop bounds each 512-row chunk's vreg live range.
        def body(c, carry):
            out_scratch[c, :, :] = pooled_block(0, pl.multiple_of(c * q, q))
            return carry

        lax.fori_loop(0, n_chunks, body, 0)
        # Copy-out with static offsets only -> lane-dense (64, 128) stores into o_ref.
        for c in range(n_chunks):
            o_ref[0, :, c * q:(c + 1) * q] = out_scratch[c, :, :]


def _pick_tiles(B, S):
    """Returns (tile_b, tile_s, chunk, s_pad)."""
    if S <= CHUNK:
        # One whole-S chunk per batch element; group batch elements so the input tile is
        # a few MiB (amortizes the fixed per-grid-step overhead for small-S workloads).
        tile_b = max(1, min(B, 2048 // max(S, 4)))
        while B % tile_b:
            tile_b -= 1
        return tile_b, S, S, S
    s_pad = pl.cdiv(S, CHUNK) * CHUNK
    n = s_pad // CHUNK
    d = 1
    for cand in range(min(n, 16), 0, -1):            # at most 16 chunks (8192 rows)/tile
        # When B == 1, keep >= 2 tiles along S so both v7x TensorCores get work.
        if n % cand == 0 and (B > 1 or n // cand >= 2 or n == 1):
            d = cand
            break
    return 1, d * CHUNK, CHUNK, s_pad


def cnn_forward(x, w1, b1, w2, b2, *, mxu_dtype=jnp.bfloat16):
    """x: (B, S, 300) f32; w1: (300, 32); b1: (32,); w2: (32, 64); b2: (64,).
    Returns (B, 64 * (S // 4)) f32, matching CNNComponentPyTorch.forward()."""
    B, S, cin = x.shape
    assert cin == C_IN
    assert S % 4 == 0, "S must be divisible by 4 (two (2,1) max-pools)"
    # TODO(synk): S not divisible by 4 (torch would floor-drop trailing rows) is not handled.

    tile_b, tile_s, chunk, s_pad = _pick_tiles(B, S)
    n_chunks = tile_s // chunk
    q = chunk // 4
    grid = (B // tile_b, s_pad // tile_s)

    if s_pad != S:
        # Pad so chunk==512 divides S (keeps lane-dense output stores and bounds the
        # VMEM tile). Padding starts on a 4-row boundary, so no pooling window mixes
        # real and padded rows; padded output columns are sliced off below.
        x = jnp.pad(x, ((0, 0), (0, s_pad - S), (0, 0)))
    # Free contiguous reshape: each packed row holds 4 consecutive seq positions.
    xr = x.reshape(B, s_pad // 4, 4 * C_IN)

    cost = pl.CostEstimate(
        flops=2 * B * S * C_IN * C1 + 2 * B * (S // 2) * C1 * C2,
        transcendentals=0,
        bytes_accessed=(4 * B * s_pad * C_IN + 4 * B * (s_pad // 4) * C2
                        + 2 * (C_IN * C1 + C1 * C2) + 4 * (C1 + C2)),
    )

    out3d = pl.pallas_call(
        functools.partial(cnn_kernel, chunk=chunk),
        out_shape=jax.ShapeDtypeStruct((B, C2, s_pad // 4), jnp.float32),
        grid_spec=pltpu.PrefetchScalarGridSpec(
            num_scalar_prefetch=0,
            grid=grid,
            in_specs=[
                # streamed input tile (double-buffered by the Pallas pipeline)
                pl.BlockSpec((tile_b, tile_s // 4, 4 * C_IN), lambda b, s: (b, s, 0)),
                # parameters: constant index_map -> fetched once, VMEM-resident
                pl.BlockSpec((C_IN, C1), lambda b, s: (0, 0)),
                pl.BlockSpec((1, C1), lambda b, s: (0, 0)),
                pl.BlockSpec((C1, C2), lambda b, s: (0, 0)),
                pl.BlockSpec((1, C2), lambda b, s: (0, 0)),
            ],
            out_specs=pl.BlockSpec((tile_b, C2, tile_s // 4), lambda b, s: (b, 0, s)),
            scratch_shapes=[pltpu.VMEM((n_chunks, C2, q), jnp.float32)],
        ),
        compiler_params=pltpu.CompilerParams(
            dimension_semantics=("parallel", "parallel"),
            vmem_limit_bytes=48 * 1024 * 1024,
        ),
        cost_estimate=cost,
    )(xr,
      w1.astype(mxu_dtype), b1.reshape(1, C1).astype(jnp.float32),
      w2.astype(mxu_dtype), b2.reshape(1, C2).astype(jnp.float32))

    if s_pad != S:
        out3d = out3d[:, :, : S // 4]
    # torch Flatten of NCHW (B, 64, S//4, 1) is channel-major then H; the kernel already
    # wrote (B, 64, S//4), so this reshape is a contiguous (free) view.
    return out3d.reshape(B, C2 * (S // 4))


if __name__ == "__main__":
    key = jax.random.PRNGKey(0)
    kx, k1, kb1, k2, kb2 = jax.random.split(key, 5)

    B, S = 2, 32                                    # small demo shapes; C_IN=300 fixed by conv1
    x = jax.random.normal(kx, (B, S, C_IN), jnp.float32)

    # torch Conv2d weight is (out, in, 1, 1); a 1x1 conv over NCHW (B, C, H, 1) is a
    # per-position channel matmul, so the weights are stored transposed as (in, out).
    w1 = jax.random.normal(k1, (C_IN, C1), jnp.float32) * 0.05
    b1 = jax.random.normal(kb1, (C1,), jnp.float32) * 0.05
    w2 = jax.random.normal(k2, (C1, C2), jnp.float32) * 0.05
    b2 = jax.random.normal(kb2, (C2,), jnp.float32) * 0.05

    out = jax.block_until_ready(cnn_forward(x, w1, b1, w2, b2))

    # Pure-JAX f32 reference of the same forward pass (dropout is unused in torch forward).
    def reference(x):
        h = jnp.maximum(jnp.einsum("bsc,cd->bsd", x, w1) + b1, 0.0)   # conv1 + ReLU
        h = jnp.maximum(h[:, 0::2, :], h[:, 1::2, :])                 # pool1
        h = jnp.maximum(jnp.einsum("bsc,cd->bsd", h, w2) + b2, 0.0)   # conv2 + ReLU
        h = jnp.maximum(h[:, 0::2, :], h[:, 1::2, :])                 # pool2
        return jnp.transpose(h, (0, 2, 1)).reshape(x.shape[0], -1)    # torch flatten

    expected = reference(x)
    assert out.shape == (B, C2 * (S // 4)), out.shape
    # bf16 MXU operands (f32 accumulation) -> small deviation from the f32 reference.
    assert jnp.allclose(out, expected, atol=2e-2, rtol=2e-2), "mismatch vs reference"
    print("KERNEL_OK")
</pallas_src>

<mosaic_0001>
module attributes {stable_mosaic.version = 11 : i64} {
  func.func @cnn_kernel(%arg0: i32, %arg1: i32, %arg2: memref<2x8x1200xf32, #tpu.memory_space<vmem>>, %arg3: memref<300x32xbf16, #tpu.memory_space<vmem>>, %arg4: memref<1x32xf32, #tpu.memory_space<vmem>>, %arg5: memref<32x64xbf16, #tpu.memory_space<vmem>>, %arg6: memref<1x64xf32, #tpu.memory_space<vmem>>, %arg7: memref<2x64x8xf32, #tpu.memory_space<vmem>>, %arg8: memref<1x64x8xf32, #tpu.memory_space<vmem>>) attributes {dimension_semantics = [#tpu.dimension_semantics<parallel>, #tpu.dimension_semantics<parallel>], iteration_bounds = array<i64: 1, 1>, scalar_prefetch = 0 : i64, scratch_operands = 1 : i64, tpu.core_type = #tpu.core_type<tc>, window_params = [{transform_indices = @transform_0, window_bounds = array<i64: 2, 8, 1200>}, {pipeline_mode = #tpu.pipeline_mode<synchronous>, transform_indices = @transform_1, window_bounds = array<i64: 300, 32>}, {pipeline_mode = #tpu.pipeline_mode<synchronous>, transform_indices = @transform_2, window_bounds = array<i64: 1, 32>}, {pipeline_mode = #tpu.pipeline_mode<synchronous>, transform_indices = @transform_3, window_bounds = array<i64: 32, 64>}, {pipeline_mode = #tpu.pipeline_mode<synchronous>, transform_indices = @transform_4, window_bounds = array<i64: 1, 64>}, {transform_indices = @transform_5, window_bounds = array<i64: 2, 64, 8>}]} {
    %c0 = arith.constant 0 : index
    %c0_0 = arith.constant 0 : index
    %0 = vector.load %arg3[%c0, %c0_0] : memref<300x32xbf16, #tpu.memory_space<vmem>>, vector<300x32xbf16>
    %c0_1 = arith.constant 0 : index
    %c0_2 = arith.constant 0 : index
    %1 = vector.load %arg5[%c0_1, %c0_2] : memref<32x64xbf16, #tpu.memory_space<vmem>>, vector<32x64xbf16>
    %c0_3 = arith.constant 0 : index
    %c0_4 = arith.constant 0 : index
    %2 = vector.load %arg4[%c0_3, %c0_4] : memref<1x32xf32, #tpu.memory_space<vmem>>, vector<1x32xf32>
    %3 = vector.shape_cast %2 : vector<1x32xf32> to vector<1x32xf32>
    %4 = vector.broadcast %3 : vector<1x32xf32> to vector<8x32xf32>
    %c0_5 = arith.constant 0 : index
    %c0_6 = arith.constant 0 : index
    %5 = vector.load %arg6[%c0_5, %c0_6] : memref<1x64xf32, #tpu.memory_space<vmem>>, vector<1x64xf32>
    %6 = vector.shape_cast %5 : vector<1x64xf32> to vector<1x64xf32>
    %7 = vector.broadcast %6 : vector<1x64xf32> to vector<8x64xf32>
    %c0_i32 = arith.constant 0 : i32
    %8 = arith.index_cast %c0_i32 : i32 to index
    %c0_7 = arith.constant 0 : index
    %c0_8 = arith.constant 0 : index
    %9 = vector.load %arg2[%8, %c0_7, %c0_8] : memref<2x8x1200xf32, #tpu.memory_space<vmem>>, vector<1x8x300xf32>
    %10 = vector.shape_cast %9 : vector<1x8x300xf32> to vector<8x300xf32>
    %11 = arith.truncf %10 : vector<8x300xf32> to vector<8x300xbf16>
    %cst = arith.constant dense<0.000000e+00> : vector<8x32xf32>
    %12 = tpu.matmul %11, %0, %cst {dimension_numbers = #tpu.dot_dimension_numbers<[1], [0], [0], [1], [0, 0, 1, 1], [], []>} : vector<8x300xbf16>, vector<300x32xbf16>, vector<8x32xf32> -> vector<8x32xf32>
    %13 = arith.addf %12, %4 : vector<8x32xf32>
    %cst_9 = arith.constant 0.000000e+00 : f32
    %14 = vector.broadcast %cst_9 : f32 to vector<8x32xf32>
    %15 = arith.maximumf %13, %14 : vector<8x32xf32>
    %16 = arith.index_cast %c0_i32 : i32 to index
    %c0_10 = arith.constant 0 : index
    %c300 = arith.constant 300 : index
    %17 = vector.load %arg2[%16, %c0_10, %c300] : memref<2x8x1200xf32, #tpu.memory_space<vmem>>, vector<1x8x300xf32>
    %18 = vector.shape_cast %17 : vector<1x8x300xf32> to vector<8x300xf32>
    %19 = arith.truncf %18 : vector<8x300xf32> to vector<8x300xbf16>
    %cst_11 = arith.constant dense<0.000000e+00> : vector<8x32xf32>
    %20 = tpu.matmul %19, %0, %cst_11 {dimension_numbers = #tpu.dot_dimension_numbers<[1], [0], [0], [1], [0, 0, 1, 1], [], []>} : vector<8x300xbf16>, vector<300x32xbf16>, vector<8x32xf32> -> vector<8x32xf32>
    %21 = arith.addf %20, %4 : vector<8x32xf32>
    %cst_12 = arith.constant 0.000000e+00 : f32
    %22 = vector.broadcast %cst_12 : f32 to vector<8x32xf32>
    %23 = arith.maximumf %21, %22 : vector<8x32xf32>
    %24 = arith.maximumf %15, %23 : vector<8x32xf32>
    %25 = arith.index_cast %c0_i32 : i32 to index
    %c0_13 = arith.constant 0 : index
    %c600 = arith.constant 600 : index
    %26 = vector.load %arg2[%25, %c0_13, %c600] : memref<2x8x1200xf32, #tpu.memory_space<vmem>>, vector<1x8x300xf32>
    %27 = vector.shape_cast %26 : vector<1x8x300xf32> to vector<8x300xf32>
    %28 = arith.truncf %27 : vector<8x300xf32> to vector<8x300xbf16>
    %cst_14 = arith.constant dense<0.000000e+00> : vector<8x32xf32>
    %29 = tpu.matmul %28, %0, %cst_14 {dimension_numbers = #tpu.dot_dimension_numbers<[1], [0], [0], [1], [0, 0, 1, 1], [], []>} : vector<8x300xbf16>, vector<300x32xbf16>, vector<8x32xf32> -> vector<8x32xf32>
    %30 = arith.addf %29, %4 : vector<8x32xf32>
    %cst_15 = arith.constant 0.000000e+00 : f32
    %31 = vector.broadcast %cst_15 : f32 to vector<8x32xf32>
    %32 = arith.maximumf %30, %31 : vector<8x32xf32>
    %33 = arith.index_cast %c0_i32 : i32 to index
    %c0_16 = arith.constant 0 : index
    %c900 = arith.constant 900 : index
    %34 = vector.load %arg2[%33, %c0_16, %c900] : memref<2x8x1200xf32, #tpu.memory_space<vmem>>, vector<1x8x300xf32>
    %35 = vector.shape_cast %34 : vector<1x8x300xf32> to vector<8x300xf32>
    %36 = arith.truncf %35 : vector<8x300xf32> to vector<8x300xbf16>
    %cst_17 = arith.constant dense<0.000000e+00> : vector<8x32xf32>
    %37 = tpu.matmul %36, %0, %cst_17 {dimension_numbers = #tpu.dot_dimension_numbers<[1], [0], [0], [1], [0, 0, 1, 1], [], []>} : vector<8x300xbf16>, vector<300x32xbf16>, vector<8x32xf32> -> vector<8x32xf32>
    %38 = arith.addf %37, %4 : vector<8x32xf32>
    %cst_18 = arith.constant 0.000000e+00 : f32
    %39 = vector.broadcast %cst_18 : f32 to vector<8x32xf32>
    %40 = arith.maximumf %38, %39 : vector<8x32xf32>
    %41 = arith.maximumf %32, %40 : vector<8x32xf32>
    %42 = arith.truncf %24 : vector<8x32xf32> to vector<8x32xbf16>
    %cst_19 = arith.constant dense<0.000000e+00> : vector<8x64xf32>
    %43 = tpu.matmul %42, %1, %cst_19 {dimension_numbers = #tpu.dot_dimension_numbers<[1], [0], [0], [1], [0, 0, 1, 1], [], []>} : vector<8x32xbf16>, vector<32x64xbf16>, vector<8x64xf32> -> vector<8x64xf32>
    %44 = arith.addf %43, %7 : vector<8x64xf32>
    %cst_20 = arith.constant 0.000000e+00 : f32
    %45 = vector.broadcast %cst_20 : f32 to vector<8x64xf32>
    %46 = arith.maximumf %44, %45 : vector<8x64xf32>
    %47 = arith.truncf %41 : vector<8x32xf32> to vector<8x32xbf16>
    %cst_21 = arith.constant dense<0.000000e+00> : vector<8x64xf32>
    %48 = tpu.matmul %47, %1, %cst_21 {dimension_numbers = #tpu.dot_dimension_numbers<[1], [0], [0], [1], [0, 0, 1, 1], [], []>} : vector<8x32xbf16>, vector<32x64xbf16>, vector<8x64xf32> -> vector<8x64xf32>
    %49 = arith.addf %48, %7 : vector<8x64xf32>
    %cst_22 = arith.constant 0.000000e+00 : f32
    %50 = vector.broadcast %cst_22 : f32 to vector<8x64xf32>
    %51 = arith.maximumf %49, %50 : vector<8x64xf32>
    %52 = arith.maximumf %46, %51 : vector<8x64xf32>
    %53 = tpu.transpose %52, [1, 0] : vector<8x64xf32> -> vector<64x8xf32>
    %54 = arith.index_cast %c0_i32 : i32 to index
    %c0_23 = arith.constant 0 : index
    %c0_24 = arith.constant 0 : index
    %55 = vector.load %arg7[%54, %c0_23, %c0_24] : memref<2x64x8xf32, #tpu.memory_space<vmem>>, vector<1x64x8xf32>
    %56 = vector.shape_cast %55 : vector<1x64x8xf32> to vector<64x8xf32>
    %57 = vector.shape_cast %53 : vector<64x8xf32> to vector<1x64x8xf32>
    tpu.vector_store %arg7[%54, %c0_23, %c0_24], %57 {strides = array<i32>} : memref<2x64x8xf32, #tpu.memory_space<vmem>>, vector<1x64x8xf32>,
    %c1_i32 = arith.constant 1 : i32
    %58 = arith.index_cast %c1_i32 : i32 to index
    %c0_25 = arith.constant 0 : index
    %c0_26 = arith.constant 0 : index
    %59 = vector.load %arg2[%58, %c0_25, %c0_26] : memref<2x8x1200xf32, #tpu.memory_space<vmem>>, vector<1x8x300xf32>
    %60 = vector.shape_cast %59 : vector<1x8x300xf32> to vector<8x300xf32>
    %61 = arith.truncf %60 : vector<8x300xf32> to vector<8x300xbf16>
    %cst_27 = arith.constant dense<0.000000e+00> : vector<8x32xf32>
    %62 = tpu.matmul %61, %0, %cst_27 {dimension_numbers = #tpu.dot_dimension_numbers<[1], [0], [0], [1], [0, 0, 1, 1], [], []>} : vector<8x300xbf16>, vector<300x32xbf16>, vector<8x32xf32> -> vector<8x32xf32>
    %63 = arith.addf %62, %4 : vector<8x32xf32>
    %cst_28 = arith.constant 0.000000e+00 : f32
    %64 = vector.broadcast %cst_28 : f32 to vector<8x32xf32>
    %65 = arith.maximumf %63, %64 : vector<8x32xf32>
    %66 = arith.index_cast %c1_i32 : i32 to index
    %c0_29 = arith.constant 0 : index
    %c300_30 = arith.constant 300 : index
    %67 = vector.load %arg2[%66, %c0_29, %c300_30] : memref<2x8x1200xf32, #tpu.memory_space<vmem>>, vector<1x8x300xf32>
    %68 = vector.shape_cast %67 : vector<1x8x300xf32> to vector<8x300xf32>
    %69 = arith.truncf %68 : vector<8x300xf32> to vector<8x300xbf16>
    %cst_31 = arith.constant dense<0.000000e+00> : vector<8x32xf32>
    %70 = tpu.matmul %69, %0, %cst_31 {dimension_numbers = #tpu.dot_dimension_numbers<[1], [0], [0], [1], [0, 0, 1, 1], [], []>} : vector<8x300xbf16>, vector<300x32xbf16>, vector<8x32xf32> -> vector<8x32xf32>
    %71 = arith.addf %70, %4 : vector<8x32xf32>
    %cst_32 = arith.constant 0.000000e+00 : f32
    %72 = vector.broadcast %cst_32 : f32 to vector<8x32xf32>
    %73 = arith.maximumf %71, %72 : vector<8x32xf32>
    %74 = arith.maximumf %65, %73 : vector<8x32xf32>
    %75 = arith.index_cast %c1_i32 : i32 to index
    %c0_33 = arith.constant 0 : index
    %c600_34 = arith.constant 600 : index
    %76 = vector.load %arg2[%75, %c0_33, %c600_34] : memref<2x8x1200xf32, #tpu.memory_space<vmem>>, vector<1x8x300xf32>
    %77 = vector.shape_cast %76 : vector<1x8x300xf32> to vector<8x300xf32>
    %78 = arith.truncf %77 : vector<8x300xf32> to vector<8x300xbf16>
    %cst_35 = arith.constant dense<0.000000e+00> : vector<8x32xf32>
    %79 = tpu.matmul %78, %0, %cst_35 {dimension_numbers = #tpu.dot_dimension_numbers<[1], [0], [0], [1], [0, 0, 1, 1], [], []>} : vector<8x300xbf16>, vector<300x32xbf16>, vector<8x32xf32> -> vector<8x32xf32>
    %80 = arith.addf %79, %4 : vector<8x32xf32>
    %cst_36 = arith.constant 0.000000e+00 : f32
    %81 = vector.broadcast %cst_36 : f32 to vector<8x32xf32>
    %82 = arith.maximumf %80, %81 : vector<8x32xf32>
    %83 = arith.index_cast %c1_i32 : i32 to index
    %c0_37 = arith.constant 0 : index
    %c900_38 = arith.constant 900 : index
    %84 = vector.load %arg2[%83, %c0_37, %c900_38] : memref<2x8x1200xf32, #tpu.memory_space<vmem>>, vector<1x8x300xf32>
    %85 = vector.shape_cast %84 : vector<1x8x300xf32> to vector<8x300xf32>
    %86 = arith.truncf %85 : vector<8x300xf32> to vector<8x300xbf16>
    %cst_39 = arith.constant dense<0.000000e+00> : vector<8x32xf32>
    %87 = tpu.matmul %86, %0, %cst_39 {dimension_numbers = #tpu.dot_dimension_numbers<[1], [0], [0], [1], [0, 0, 1, 1], [], []>} : vector<8x300xbf16>, vector<300x32xbf16>, vector<8x32xf32> -> vector<8x32xf32>
    %88 = arith.addf %87, %4 : vector<8x32xf32>
    %cst_40 = arith.constant 0.000000e+00 : f32
    %89 = vector.broadcast %cst_40 : f32 to vector<8x32xf32>
    %90 = arith.maximumf %88, %89 : vector<8x32xf32>
    %91 = arith.maximumf %82, %90 : vector<8x32xf32>
    %92 = arith.truncf %74 : vector<8x32xf32> to vector<8x32xbf16>
    %cst_41 = arith.constant dense<0.000000e+00> : vector<8x64xf32>
    %93 = tpu.matmul %92, %1, %cst_41 {dimension_numbers = #tpu.dot_dimension_numbers<[1], [0], [0], [1], [0, 0, 1, 1], [], []>} : vector<8x32xbf16>, vector<32x64xbf16>, vector<8x64xf32> -> vector<8x64xf32>
    %94 = arith.addf %93, %7 : vector<8x64xf32>
    %cst_42 = arith.constant 0.000000e+00 : f32
    %95 = vector.broadcast %cst_42 : f32 to vector<8x64xf32>
    %96 = arith.maximumf %94, %95 : vector<8x64xf32>
    %97 = arith.truncf %91 : vector<8x32xf32> to vector<8x32xbf16>
    %cst_43 = arith.constant dense<0.000000e+00> : vector<8x64xf32>
    %98 = tpu.matmul %97, %1, %cst_43 {dimension_numbers = #tpu.dot_dimension_numbers<[1], [0], [0], [1], [0, 0, 1, 1], [], []>} : vector<8x32xbf16>, vector<32x64xbf16>, vector<8x64xf32> -> vector<8x64xf32>
    %99 = arith.addf %98, %7 : vector<8x64xf32>
    %cst_44 = arith.constant 0.000000e+00 : f32
    %100 = vector.broadcast %cst_44 : f32 to vector<8x64xf32>
    %101 = arith.maximumf %99, %100 : vector<8x64xf32>
    %102 = arith.maximumf %96, %101 : vector<8x64xf32>
    %103 = tpu.transpose %102, [1, 0] : vector<8x64xf32> -> vector<64x8xf32>
    %104 = arith.index_cast %c1_i32 : i32 to index
    %c0_45 = arith.constant 0 : index
    %c0_46 = arith.constant 0 : index
    %105 = vector.load %arg7[%104, %c0_45, %c0_46] : memref<2x64x8xf32, #tpu.memory_space<vmem>>, vector<1x64x8xf32>
    %106 = vector.shape_cast %105 : vector<1x64x8xf32> to vector<64x8xf32>
    %107 = vector.shape_cast %103 : vector<64x8xf32> to vector<1x64x8xf32>
    tpu.vector_store %arg7[%104, %c0_45, %c0_46], %107 {strides = array<i32>} : memref<2x64x8xf32, #tpu.memory_space<vmem>>, vector<1x64x8xf32>,
    %c2_i32 = arith.constant 2 : i32
    return
  }
  func.func @transform_0(%arg0: i32, %arg1: i32) -> (i32, i32, i32) {
    %c0_i32 = arith.constant 0 : i32
    %c0_i32_0 = arith.constant 0 : i32
    return %arg0, %arg1, %c0_i32 : i32, i32, i32
  }
  func.func @transform_1(%arg0: i32, %arg1: i32) -> (i32, i32) {
    %c0_i32 = arith.constant 0 : i32
    %c0_i32_0 = arith.constant 0 : i32
    %c0_i32_1 = arith.constant 0 : i32
    return %c0_i32, %c0_i32_0 : i32, i32
  }
  func.func @transform_2(%arg0: i32, %arg1: i32) -> (i32, i32) {
    %c0_i32 = arith.constant 0 : i32
    %c0_i32_0 = arith.constant 0 : i32
    %c0_i32_1 = arith.constant 0 : i32
    return %c0_i32, %c0_i32_0 : i32, i32
  }
  func.func @transform_3(%arg0: i32, %arg1: i32) -> (i32, i32) {
    %c0_i32 = arith.constant 0 : i32
    %c0_i32_0 = arith.constant 0 : i32
    %c0_i32_1 = arith.constant 0 : i32
    return %c0_i32, %c0_i32_0 : i32, i32
  }
  func.func @transform_4(%arg0: i32, %arg1: i32) -> (i32, i32) {
    %c0_i32 = arith.constant 0 : i32
    %c0_i32_0 = arith.constant 0 : i32
    %c0_i32_1 = arith.constant 0 : i32
    return %c0_i32, %c0_i32_0 : i32, i32
  }
  func.func @transform_5(%arg0: i32, %arg1: i32) -> (i32, i32, i32) {
    %c0_i32 = arith.constant 0 : i32
    %c0_i32_0 = arith.constant 0 : i32
    return %arg0, %c0_i32, %arg1 : i32, i32, i32
  }
}

</mosaic_0001>

<llo_original>
// kernel: tpu_custom_call.1
$region0: #{tpu_custom_call.1}
  #allocation0 [shape = 'u32[]', space=smem, size = 0x4, offset = 0x4, fixed_abs, tag = 'smem constant byte address 0x4 - core index']
  #allocation1 [shape = 'u32[72,128]{1,0:T(1,128)}', space=vmem, size = 0x9000, scoped, tag = 'internal scratch']
  #allocation2 [shape = 'f32[1,64,8]{2,1,0:T(8,128)}', space=vmem, size = 0x8000, scoped, tag = 'scratch operand']
  %s0 = inlined_call_operand.vmem [shape: f32[2,8,1200], index: 0, kind: input, shape index: {}]
  %s1 = inlined_call_operand.vmem [shape: bf16[300,32], index: 1, kind: input, shape index: {}]
  %s2 = inlined_call_operand.vmem [shape: f32[1,32], index: 2, kind: input, shape index: {}]
  %s3 = inlined_call_operand.vmem [shape: bf16[32,64], index: 3, kind: input, shape index: {}]
  %s4 = inlined_call_operand.vmem [shape: f32[1,64], index: 4, kind: input, shape index: {}]
  %s5 = inlined_call_operand.vmem [shape: f32[2,64,8], index: 5, kind: output, shape index: {}]
  %s6 = sld [smem:[#allocation0]]
  $region30: #{tpu_custom_call.1} parent=0
    _
  %s8 = ssub.s32 1, %s6
  %s9 = scalar_select 0, %s8, %s6
  // Predicated region
  $region2: #{tpu_custom_call.1} parent=0 // pred_check
    _
  $region3: #{tpu_custom_call.1} parent=0 // pred_check_branch
    %11 = sbr.rel (0) target = $region5
  $region4: #{tpu_custom_call.1} parent=0 // pred_region
    _
  $region5: #{tpu_custom_call.1} parent=0 // pred_fallthru
    _
  // Predicated region
  $region6: #{tpu_custom_call.1} parent=0 // pred_check
    _
  $region7: #{tpu_custom_call.1} parent=0 // pred_check_branch
    %13 = sbr.rel (0) target = $region9
  $region8: #{tpu_custom_call.1} parent=0 // pred_region
    _
  $region9: #{tpu_custom_call.1} parent=0 // pred_fallthru
    _
  // Predicated region
  $region10: #{tpu_custom_call.1} parent=0 // pred_check
    _
  $region11: #{tpu_custom_call.1} parent=0 // pred_check_branch
    %15 = sbr.rel (0) target = $region13
  $region12: #{tpu_custom_call.1} parent=0 // pred_region
    _
  $region13: #{tpu_custom_call.1} parent=0 // pred_fallthru
    _
  // Predicated region
  $region14: #{tpu_custom_call.1} parent=0 // pred_check
    _
  $region15: #{tpu_custom_call.1} parent=0 // pred_check_branch
    %17 = sbr.rel (0) target = $region17
  $region16: #{tpu_custom_call.1} parent=0 // pred_region
    _
  $region17: #{tpu_custom_call.1} parent=0 // pred_fallthru
    _
  // Predicated region
  $region18: #{tpu_custom_call.1} parent=0 // pred_check
    _
  $region19: #{tpu_custom_call.1} parent=0 // pred_check_branch
    %19 = sbr.rel (0) target = $region21
  $region20: #{tpu_custom_call.1} parent=0 // pred_region
    _
  $region21: #{tpu_custom_call.1} parent=0 // pred_fallthru
    _
  %v21 = vld [vmem:[%s1] sm:$0xf]
  %v22 = vld [vmem:[%s1 + $0x4] sm:$0xf]
  %v23 = vld [vmem:[%s1 + $0x8] sm:$0xf]
  %v24 = vld [vmem:[%s1 + $0xc] sm:$0xf]
  %v25 = vld [vmem:[%s1 + $0x10] sm:$0xf]
  %v26 = vld [vmem:[%s1 + $0x14] sm:$0xf]
  %v27 = vld [vmem:[%s1 + $0x18] sm:$0xf]
  %v28 = vld [vmem:[%s1 + $0x1c] sm:$0xf]
  %v29 = vld [vmem:[%s1 + $0x20] sm:$0xf]
  %v30 = vld [vmem:[%s1 + $0x24] sm:$0xf]
  %v31 = vld [vmem:[%s1 + $0x28] sm:$0xf]
  %v32 = vld [vmem:[%s1 + $0x2c] sm:$0xf]
  %v33 = vld [vmem:[%s1 + $0x30] sm:$0xf]
  %v34 = vld [vmem:[%s1 + $0x34] sm:$0xf]
  %v35 = vld [vmem:[%s1 + $0x38] sm:$0xf]
  %v36 = vld [vmem:[%s1 + $0x3c] sm:$0xf]
  %v37 = vld [vmem:[%s1 + $0x40] sm:$0xf]
  %v38 = vld [vmem:[%s1 + $0x44] sm:$0xf]
  %v39 = vld [vmem:[%s1 + $0x48] sm:$0xf]
  %v40 = vld [vmem:[%s1 + $0x4c] sm:$0xf]
  %v41 = vld [vmem:[%s1 + $0x50] sm:$0xf]
  %v42 = vld [vmem:[%s1 + $0x54] sm:$0xf]
  %v43 = vld [vmem:[%s1 + $0x58] sm:$0xf]
  %v44 = vld [vmem:[%s1 + $0x5c] sm:$0xf]
  %v45 = vld [vmem:[%s1 + $0x60] sm:$0xf]
  %v46 = vld [vmem:[%s1 + $0x64] sm:$0xf]
  %v47 = vld [vmem:[%s1 + $0x68] sm:$0xf]
  %v48 = vld [vmem:[%s1 + $0x6c] sm:$0xf]
  %v49 = vld [vmem:[%s1 + $0x70] sm:$0xf]
  %v50 = vld [vmem:[%s1 + $0x74] sm:$0xf]
  %v51 = vld [vmem:[%s1 + $0x78] sm:$0xf]
  %v52 = vld [vmem:[%s1 + $0x7c] sm:$0xf]
  %v53 = vld [vmem:[%s1 + $0x80] sm:$0xf]
  %v54 = vld [vmem:[%s1 + $0x84] sm:$0xf]
  %v55 = vld [vmem:[%s1 + $0x88] sm:$0xf]
  %v56 = vld [vmem:[%s1 + $0x8c] sm:$0xf]
  %v57 = vld [vmem:[%s1 + $0x90] sm:$0xf]
  %v58 = vld [vmem:[%s1 + $0x94] sm:$0x3]
  %v59 = vld [vmem:[%s3] sm:$0xf]
  %v60 = vld [vmem:[%s3 + $0x4] sm:$0xf]
  %v61 = vld [vmem:[%s3 + $0x8] sm:$0xf]
  %v62 = vld [vmem:[%s3 + $0xc] sm:$0xf]
  %v63 = vld [vmem:[%s2] sm:$0x1]
  %v65 = vperm.slane %v63, 0
  %v67 = vld [vmem:[%s4] sm:$0x1]
  %v69 = vperm.slane %v67, 0
  %v71 = vld [vmem:[%s0] sm:$0xff]
  %v72 = vld [vmem:[%s0 + $0x8] sm:$0xff]
  %v73 = vld [vmem:[%s0 + $0x10] sm:$0xff]
  %v74 = vpack.c.bf16 %v71, %v71
  %v75 = vpack.c.bf16 %v72, %v72
  %v76 = vpack.c.bf16 %v73, %v73
  %v115 = vunpack.c.l.b16 %v21
  %v116 = vunpack.c.l.b16 %v22
  %v117 = vunpack.c.l.b16 %v23
  %v118 = vunpack.c.l.b16 %v24
  %v119 = vunpack.c.l.b16 %v25
  %v120 = vunpack.c.l.b16 %v26
  %v121 = vunpack.c.l.b16 %v27
  %v122 = vunpack.c.l.b16 %v28
  %v123 = vunpack.c.l.b16 %v29
  %v124 = vunpack.c.l.b16 %v30
  %v125 = vunpack.c.l.b16 %v31
  %v126 = vunpack.c.l.b16 %v32
  %v127 = vunpack.c.l.b16 %v33
  %v128 = vunpack.c.l.b16 %v34
  %v129 = vunpack.c.l.b16 %v35
  %v130 = vunpack.c.l.b16 %v36
  %v131 = vunpack.c.l.b16 %v37
  %v132 = vunpack.c.l.b16 %v38
  %v133 = vunpack.c.l.b16 %v39
  %v134 = vunpack.c.l.b16 %v40
  %v135 = vunpack.c.l.b16 %v41
  %v136 = vunpack.c.l.b16 %v42
  %v137 = vunpack.c.l.b16 %v43
  %v138 = vunpack.c.l.b16 %v44
  %v139 = vunpack.c.l.b16 %v45
  %v140 = vunpack.c.l.b16 %v46
  %v141 = vunpack.c.l.b16 %v47
  %v142 = vunpack.c.l.b16 %v48
  %v143 = vunpack.c.l.b16 %v49
  %v144 = vunpack.c.l.b16 %v50
  %v145 = vunpack.c.l.b16 %v51
  %v146 = vunpack.c.l.b16 %v52
  %v147 = vunpack.c.l.b16 %v53
  %v148 = vunpack.c.l.b16 %v54
  %v149 = vunpack.c.l.b16 %v55
  %v150 = vunpack.c.l.b16 %v56
  %v151 = vunpack.c.l.b16 %v57
  %v152 = vunpack.c.l.b16 %v58
  %v153 = vpack.c.b16 %v116, %v115
  %v154 = vpack.c.b16 %v118, %v117
  %v155 = vpack.c.b16 %v120, %v119
  %v156 = vpack.c.b16 %v122, %v121
  %v157 = vpack.c.b16 %v124, %v123
  %v158 = vpack.c.b16 %v126, %v125
  %v159 = vpack.c.b16 %v128, %v127
  %v160 = vpack.c.b16 %v130, %v129
  %v161 = vpack.c.b16 %v132, %v131
  %v162 = vpack.c.b16 %v134, %v133
  %v163 = vpack.c.b16 %v136, %v135
  %v164 = vpack.c.b16 %v138, %v137
  %v165 = vpack.c.b16 %v140, %v139
  %v166 = vpack.c.b16 %v142, %v141
  %v167 = vpack.c.b16 %v144, %v143
  %v168 = vpack.c.b16 %v146, %v145
  %v169 = vpack.c.b16 %v148, %v147
  %v170 = vpack.c.b16 %v150, %v149
  %v171 = vpack.c.b16 %v152, %v151
  %vm190 = vcmask 359424
  %v192 = vsel %vm190, %v76, 0
  %vm194 = vcmask 1045504
  %v196 = vsel %vm194, %v171, 0
  %198 = vmatpush.bf16.msra.mxu0 %v160
  %199 = vmatpush.bf16.msra.mxu0 %v159
  %200 = vmatpush.bf16.msra.mxu0 %v158
  %201 = vmatpush.bf16.msra.mxu0 %v157
  %202 = vmatpush.bf16.msra.mxu0 %v156
  %203 = vmatpush.bf16.msra.mxu0 %v155
  %204 = vmatpush.bf16.msra.mxu0 %v154
  %205 = vmatpush.bf16.msra.mxu0 %v153
  %206 = vmatmul.bf16.gmra.mxu0 %v74
  %v207 = vpop.f32.mrf.mxu0
  %v208 = vadd.f32 %v65, %v207
  %v209 = vpop.f32.mrf.mxu0
  %210 = vdwg.mxu0
  %211 = vmatpush.bf16.msra.mxu0 %v168
  %212 = vmatpush.bf16.msra.mxu0 %v167
  %213 = vmatpush.bf16.msra.mxu0 %v166
  %214 = vmatpush.bf16.msra.mxu0 %v165
  %215 = vmatpush.bf16.msra.mxu0 %v164
  %216 = vmatpush.bf16.msra.mxu0 %v163
  %217 = vmatpush.bf16.msra.mxu0 %v162
  %218 = vmatpush.bf16.msra.mxu0 %v161
  %219 = vmatmul.bf16.gmra.mxu0 %v75
  %v220 = vpop.f32.mrf.mxu0
  %v221 = vadd.f32 %v208, %v220
  %v222 = vpop.f32.mrf.mxu0
  %223 = vdwg.mxu0
  %224 = vmatpush.bf16.msra.mxu0 0
  %225 = vmatpush.bf16.msra.mxu0 0
  %226 = vmatpush.bf16.msra.mxu0 0
  %227 = vmatpush.bf16.msra.mxu0 0
  %228 = vmatpush.bf16.msra.mxu0 0
  %229 = vmatpush.bf16.msra.mxu0 %v196
  %230 = vmatpush.bf16.msra.mxu0 %v170
  %231 = vmatpush.bf16.msra.mxu0 %v169
  %232 = vmatmul.bf16.gmra.mxu0 %v192
  %v233 = vpop.f32.mrf.mxu0
  %v234 = vadd.f32 %v221, %v233
  %v235 = vpop.f32.mrf.mxu0
  %236 = vdwg.mxu0
  %v237 = vmax.f32 %v234, 0.0
  %v238 = vld [vmem:[%s0 + $0x10] sm:$0xff]
  %v239 = vld [vmem:[%s0 + $0x18] sm:$0xff]
  %v240 = vld [vmem:[%s0 + $0x20] sm:$0xff]
  %v241 = vpack.c.bf16 %v238, %v238
  %v242 = vpack.c.bf16 %v239, %v239
  %v243 = vpack.c.bf16 %v240, %v240
  %247 = vrot.lane.b32.xlu0 %v241, 84
  %v248 = vpop.permute.xlu0 %247
  %249 = vrot.lane.b32.xlu0 %v242, 84
  %v250 = vpop.permute.xlu0 %249
  %251 = vrot.lane.b32.xlu0 %v243, 84
  %v252 = vpop.permute.xlu0 %251
  %vm253 = vcmask 687104
  %v254 = vsel %vm253, %v248, %v250
  %v255 = vsel %vm253, %v250, %v252
  %v259 = vsel %vm190, %v252, 0
  %261 = vmatpush.bf16.msra.mxu0 %v160
  %262 = vmatpush.bf16.msra.mxu0 %v159
  %263 = vmatpush.bf16.msra.mxu0 %v158
  %264 = vmatpush.bf16.msra.mxu0 %v157
  %265 = vmatpush.bf16.msra.mxu0 %v156
  %266 = vmatpush.bf16.msra.mxu0 %v155
  %267 = vmatpush.bf16.msra.mxu0 %v154
  %268 = vmatpush.bf16.msra.mxu0 %v153
  %269 = vmatmul.bf16.gmra.mxu0 %v254
  %v270 = vpop.f32.mrf.mxu0
  %v271 = vadd.f32 %v65, %v270
  %v272 = vpop.f32.mrf.mxu0
  %273 = vdwg.mxu0
  %274 = vmatpush.bf16.msra.mxu0 %v168
  %275 = vmatpush.bf16.msra.mxu0 %v167
  %276 = vmatpush.bf16.msra.mxu0 %v166
  %277 = vmatpush.bf16.msra.mxu0 %v165
  %278 = vmatpush.bf16.msra.mxu0 %v164
  %279 = vmatpush.bf16.msra.mxu0 %v163
  %280 = vmatpush.bf16.msra.mxu0 %v162
  %281 = vmatpush.bf16.msra.mxu0 %v161
  %282 = vmatmul.bf16.gmra.mxu0 %v255
  %v283 = vpop.f32.mrf.mxu0
  %v284 = vadd.f32 %v271, %v283
  %v285 = vpop.f32.mrf.mxu0
  %286 = vdwg.mxu0
  %287 = vmatpush.bf16.msra.mxu0 0
  %288 = vmatpush.bf16.msra.mxu0 0
  %289 = vmatpush.bf16.msra.mxu0 0
  %290 = vmatpush.bf16.msra.mxu0 0
  %291 = vmatpush.bf16.msra.mxu0 0
  %292 = vmatpush.bf16.msra.mxu0 %v196
  %293 = vmatpush.bf16.msra.mxu0 %v170
  %294 = vmatpush.bf16.msra.mxu0 %v169
  %295 = vmatmul.bf16.gmra.mxu0 %v259
  %v296 = vpop.f32.mrf.mxu0
  %v297 = vadd.f32 %v284, %v296
  %v298 = vpop.f32.mrf.mxu0
  %299 = vdwg.mxu0
  %v300 = vmax.f32 %v297, 0.0
  %v301 = vmax.f32 %v237, %v300
  %v302 = vld [vmem:[%s0 + $0x20] sm:$0xff]
  %v303 = vld [vmem:[%s0 + $0x28] sm:$0xff]
  %v304 = vld [vmem:[%s0 + $0x30] sm:$0xff]
  %v305 = vld [vmem:[%s0 + $0x38] sm:$0xff]
  %v306 = vpack.c.bf16 %v302, %v302
  %v307 = vpack.c.bf16 %v303, %v303
  %v308 = vpack.c.bf16 %v304, %v304
  %v309 = vpack.c.bf16 %v305, %v305
  %314 = vrot.lane.b32.xlu0 %v306, 40
  %v315 = vpop.permute.xlu0 %314
  %316 = vrot.lane.b32.xlu0 %v307, 40
  %v317 = vpop.permute.xlu0 %316
  %318 = vrot.lane.b32.xlu0 %v308, 40
  %v319 = vpop.permute.xlu0 %318
  %320 = vrot.lane.b32.xlu0 %v309, 40
  %v321 = vpop.permute.xlu0 %320
  %vm322 = vcmask 326656
  %v323 = vsel %vm322, %v315, %v317
  %v324 = vsel %vm322, %v317, %v319
  %v325 = vsel %vm322, %v319, %v321
  %v329 = vsel %vm190, %v325, 0
  %331 = vmatpush.bf16.msra.mxu0 %v160
  %332 = vmatpush.bf16.msra.mxu0 %v159
  %333 = vmatpush.bf16.msra.mxu0 %v158
  %334 = vmatpush.bf16.msra.mxu0 %v157
  %335 = vmatpush.bf16.msra.mxu0 %v156
  %336 = vmatpush.bf16.msra.mxu0 %v155
  %337 = vmatpush.bf16.msra.mxu0 %v154
  %338 = vmatpush.bf16.msra.mxu0 %v153
  %339 = vmatmul.bf16.gmra.mxu0 %v323
  %v340 = vpop.f32.mrf.mxu0
  %v341 = vadd.f32 %v65, %v340
  %v342 = vpop.f32.mrf.mxu0
  %343 = vdwg.mxu0
  %344 = vmatpush.bf16.msra.mxu0 %v168
  %345 = vmatpush.bf16.msra.mxu0 %v167
  %346 = vmatpush.bf16.msra.mxu0 %v166
  %347 = vmatpush.bf16.msra.mxu0 %v165
  %348 = vmatpush.bf16.msra.mxu0 %v164
  %349 = vmatpush.bf16.msra.mxu0 %v163
  %350 = vmatpush.bf16.msra.mxu0 %v162
  %351 = vmatpush.bf16.msra.mxu0 %v161
  %352 = vmatmul.bf16.gmra.mxu0 %v324
  %v353 = vpop.f32.mrf.mxu0
  %v354 = vadd.f32 %v341, %v353
  %v355 = vpop.f32.mrf.mxu0
  %356 = vdwg.mxu0
  %357 = vmatpush.bf16.msra.mxu0 0
  %358 = vmatpush.bf16.msra.mxu0 0
  %359 = vmatpush.bf16.msra.mxu0 0
  %360 = vmatpush.bf16.msra.mxu0 0
  %361 = vmatpush.bf16.msra.mxu0 0
  %362 = vmatpush.bf16.msra.mxu0 %v196
  %363 = vmatpush.bf16.msra.mxu0 %v170
  %364 = vmatpush.bf16.msra.mxu0 %v169
  %365 = vmatmul.bf16.gmra.mxu0 %v329
  %v366 = vpop.f32.mrf.mxu0
  %v367 = vadd.f32 %v354, %v366
  %v368 = vpop.f32.mrf.mxu0
  %369 = vdwg.mxu0
  %v370 = vmax.f32 %v367, 0.0
  %v371 = vld [vmem:[%s0 + $0x38] sm:$0xff]
  %v372 = vld [vmem:[%s0 + $0x40] sm:$0xff]
  %v373 = vld [vmem:[%s0 + $0x48] sm:$0xff]
  %v374 = vpack.c.bf16 %v371, %v371
  %v375 = vpack.c.bf16 %v372, %v372
  %v376 = vpack.c.bf16 %v373, %v373
  %380 = vrot.lane.b32.xlu0 %v374, 124
  %v381 = vpop.permute.xlu0 %380
  %382 = vrot.lane.b32.xlu0 %v375, 124
  %v383 = vpop.permute.xlu0 %382
  %384 = vrot.lane.b32.xlu0 %v376, 124
  %v385 = vpop.permute.xlu0 %384
  %vm386 = vcmask 1014784
  %v387 = vsel %vm386, %v381, %v383
  %v388 = vsel %vm386, %v383, %v385
  %v392 = vsel %vm190, %v385, 0
  %394 = vmatpush.bf16.msra.mxu0 %v160
  %395 = vmatpush.bf16.msra.mxu0 %v159
  %396 = vmatpush.bf16.msra.mxu0 %v158
  %397 = vmatpush.bf16.msra.mxu0 %v157
  %398 = vmatpush.bf16.msra.mxu0 %v156
  %399 = vmatpush.bf16.msra.mxu0 %v155
  %400 = vmatpush.bf16.msra.mxu0 %v154
  %401 = vmatpush.bf16.msra.mxu0 %v153
  %402 = vmatmul.bf16.gmra.mxu0 %v387
  %v403 = vpop.f32.mrf.mxu0
  %v404 = vadd.f32 %v65, %v403
  %v405 = vpop.f32.mrf.mxu0
  %406 = vdwg.mxu0
  %407 = vmatpush.bf16.msra.mxu0 %v168
  %408 = vmatpush.bf16.msra.mxu0 %v167
  %409 = vmatpush.bf16.msra.mxu0 %v166
  %410 = vmatpush.bf16.msra.mxu0 %v165
  %411 = vmatpush.bf16.msra.mxu0 %v164
  %412 = vmatpush.bf16.msra.mxu0 %v163
  %413 = vmatpush.bf16.msra.mxu0 %v162
  %414 = vmatpush.bf16.msra.mxu0 %v161
  %415 = vmatmul.bf16.gmra.mxu0 %v388
  %v416 = vpop.f32.mrf.mxu0
  %v417 = vadd.f32 %v404, %v416
  %v418 = vpop.f32.mrf.mxu0
  %419 = vdwg.mxu0
  %420 = vmatpush.bf16.msra.mxu0 0
  %421 = vmatpush.bf16.msra.mxu0 0
  %422 = vmatpush.bf16.msra.mxu0 0
  %423 = vmatpush.bf16.msra.mxu0 0
  %424 = vmatpush.bf16.msra.mxu0 0
  %425 = vmatpush.bf16.msra.mxu0 %v196
  %426 = vmatpush.bf16.msra.mxu0 %v170
  %427 = vmatpush.bf16.msra.mxu0 %v169
  %428 = vmatmul.bf16.gmra.mxu0 %v392
  %v429 = vpop.f32.mrf.mxu0
  %v430 = vadd.f32 %v417, %v429
  %v431 = vpop.f32.mrf.mxu0
  %432 = vdwg.mxu0
  %v433 = vmax.f32 %v430, 0.0
  %v434 = vmax.f32 %v370, %v433
  %v435 = vpack.c.bf16 %v301, %v301
  %v440 = vunpack.c.l.b16 %v59
  %v441 = vunpack.c.l.b16 %v60
  %v442 = vunpack.c.l.b16 %v61
  %v443 = vunpack.c.l.b16 %v62
  %v444 = vpack.c.b16 %v441, %v440
  %v445 = vpack.c.b16 %v443, %v442
  %vm448 = vcmask 261120
  %v450 = vsel %vm448, %v435, 0
  %452 = vmatpush.bf16.msra.mxu0 0
  %453 = vmatpush.bf16.msra.mxu0 0
  %454 = vmatpush.bf16.msra.mxu0 0
  %455 = vmatpush.bf16.msra.mxu0 0
  %456 = vmatpush.bf16.msra.mxu0 0
  %457 = vmatpush.bf16.msra.mxu0 0
  %458 = vmatpush.bf16.msra.mxu0 %v445
  %459 = vmatpush.bf16.msra.mxu0 %v444
  %460 = vmatmul.bf16.gmra.mxu0 %v450
  %v461 = vpop.f32.mrf.mxu0
  %v462 = vadd.f32 %v69, %v461
  %v463 = vpop.f32.mrf.mxu0
  %464 = vdwg.mxu0
  %v465 = vmax.f32 %v462, 0.0
  %v466 = vpack.c.bf16 %v434, %v434
  %v468 = vsel %vm448, %v466, 0
  %470 = vmatpush.bf16.msra.mxu0 0
  %471 = vmatpush.bf16.msra.mxu0 0
  %472 = vmatpush.bf16.msra.mxu0 0
  %473 = vmatpush.bf16.msra.mxu0 0
  %474 = vmatpush.bf16.msra.mxu0 0
  %475 = vmatpush.bf16.msra.mxu0 0
  %476 = vmatpush.bf16.msra.mxu0 %v445
  %477 = vmatpush.bf16.msra.mxu0 %v444
  %478 = vmatmul.bf16.gmra.mxu0 %v468
  %v479 = vpop.f32.mrf.mxu0
  %v480 = vadd.f32 %v69, %v479
  %v481 = vpop.f32.mrf.mxu0
  %482 = vdwg.mxu0
  %v483 = vmax.f32 %v480, 0.0
  %v484 = vmax.f32 %v465, %v483
  %485 = vxpose.xlu0.b32.start [1/16] %v484, 128
  %486 = vxpose.xlu0.b32.cont [2/16] 0.0, 128
  %487 = vxpose.xlu0.b32.cont [3/16] 0.0, 128
  %488 = vxpose.xlu0.b32.cont [4/16] 0.0, 128
  %489 = vxpose.xlu0.b32.cont [5/16] 0.0, 128
  %490 = vxpose.xlu0.b32.cont [6/16] 0.0, 128
  %491 = vxpose.xlu0.b32.cont [7/16] 0.0, 128
  %492 = vxpose.xlu0.b32.cont [8/16] 0.0, 128
  %493 = vxpose.xlu0.b32.cont [9/16] 0.0, 128
  %494 = vxpose.xlu0.b32.cont [10/16] 0.0, 128
  %495 = vxpose.xlu0.b32.cont [11/16] 0.0, 128
  %496 = vxpose.xlu0.b32.cont [12/16] 0.0, 128
  %497 = vxpose.xlu0.b32.cont [13/16] 0.0, 128
  %498 = vxpose.xlu0.b32.cont [14/16] 0.0, 128
  %499 = vxpose.xlu0.b32.cont [15/16] 0.0, 128
  %500 = vxpose.xlu0.b32.end [16/16] 0.0, 128
  %v501 = vpop.trf.xlu0
  %v502 = vpop.trf.xlu0
  %v503 = vpop.trf.xlu0
  %v504 = vpop.trf.xlu0
  %v505 = vpop.trf.xlu0
  %v506 = vpop.trf.xlu0
  %v507 = vpop.trf.xlu0
  %v508 = vpop.trf.xlu0
  %v509 = vpop.trf.xlu0
  %v510 = vpop.trf.xlu0
  %v511 = vpop.trf.xlu0
  %v512 = vpop.trf.xlu0
  %v513 = vpop.trf.xlu0
  %v514 = vpop.trf.xlu0
  %v515 = vpop.trf.xlu0
  %v516 = vpop.trf.xlu0
  %vm517 = vcmask 64512
  %518 = vst.msk [vmem:[%s5] sm:$0xff] %vm517, %v501
  %519 = vst.msk [vmem:[%s5 + $0x8] sm:$0xff] %vm517, %v502
  %520 = vst.msk [vmem:[%s5 + $0x10] sm:$0xff] %vm517, %v503
  %521 = vst.msk [vmem:[%s5 + $0x18] sm:$0xff] %vm517, %v504
  %522 = vst.msk [vmem:[%s5 + $0x20] sm:$0xff] %vm517, %v505
  %523 = vst.msk [vmem:[%s5 + $0x28] sm:$0xff] %vm517, %v506
  %524 = vst.msk [vmem:[%s5 + $0x30] sm:$0xff] %vm517, %v507
  %525 = vst.msk [vmem:[%s5 + $0x38] sm:$0xff] %vm517, %v508
  %s526 = scalar_lea.vmem %s0, 80
  %v527 = vld [vmem:[%s526] sm:$0xff]
  %v528 = vld [vmem:[%s526 + $0x8] sm:$0xff]
  %v529 = vld [vmem:[%s526 + $0x10] sm:$0xff]
  %v530 = vpack.c.bf16 %v527, %v527
  %v531 = vpack.c.bf16 %v528, %v528
  %v532 = vpack.c.bf16 %v529, %v529
  %v534 = vsel %vm190, %v532, 0
  %536 = vmatpush.bf16.msra.mxu0 %v160
  %537 = vmatpush.bf16.msra.mxu0 %v159
  %538 = vmatpush.bf16.msra.mxu0 %v158
  %539 = vmatpush.bf16.msra.mxu0 %v157
  %540 = vmatpush.bf16.msra.mxu0 %v156
  %541 = vmatpush.bf16.msra.mxu0 %v155
  %542 = vmatpush.bf16.msra.mxu0 %v154
  %543 = vmatpush.bf16.msra.mxu0 %v153
  %544 = vmatmul.bf16.gmra.mxu0 %v530
  %v545 = vpop.f32.mrf.mxu0
  %v546 = vadd.f32 %v65, %v545
  %v547 = vpop.f32.mrf.mxu0
  %548 = vdwg.mxu0
  %549 = vmatpush.bf16.msra.mxu0 %v168
  %550 = vmatpush.bf16.msra.mxu0 %v167
  %551 = vmatpush.bf16.msra.mxu0 %v166
  %552 = vmatpush.bf16.msra.mxu0 %v165
  %553 = vmatpush.bf16.msra.mxu0 %v164
  %554 = vmatpush.bf16.msra.mxu0 %v163
  %555 = vmatpush.bf16.msra.mxu0 %v162
  %556 = vmatpush.bf16.msra.mxu0 %v161
  %557 = vmatmul.bf16.gmra.mxu0 %v531
  %v558 = vpop.f32.mrf.mxu0
  %v559 = vadd.f32 %v546, %v558
  %v560 = vpop.f32.mrf.mxu0
  %561 = vdwg.mxu0
  %562 = vmatpush.bf16.msra.mxu0 0
  %563 = vmatpush.bf16.msra.mxu0 0
  %564 = vmatpush.bf16.msra.mxu0 0
  %565 = vmatpush.bf16.msra.mxu0 0
  %566 = vmatpush.bf16.msra.mxu0 0
  %567 = vmatpush.bf16.msra.mxu0 %v196
  %568 = vmatpush.bf16.msra.mxu0 %v170
  %569 = vmatpush.bf16.msra.mxu0 %v169
  %570 = vmatmul.bf16.gmra.mxu0 %v534
  %v571 = vpop.f32.mrf.mxu0
  %v572 = vadd.f32 %v559, %v571
  %v573 = vpop.f32.mrf.mxu0
  %574 = vdwg.mxu0
  %v575 = vmax.f32 %v572, 0.0
  %v576 = vld [vmem:[%s526 + $0x10] sm:$0xff]
  %v577 = vld [vmem:[%s526 + $0x18] sm:$0xff]
  %v578 = vld [vmem:[%s526 + $0x20] sm:$0xff]
  %v579 = vpack.c.bf16 %v576, %v576
  %v580 = vpack.c.bf16 %v577, %v577
  %v581 = vpack.c.bf16 %v578, %v578
  %585 = vrot.lane.b32.xlu0 %v579, 84
  %v586 = vpop.permute.xlu0 %585
  %587 = vrot.lane.b32.xlu0 %v580, 84
  %v588 = vpop.permute.xlu0 %587
  %589 = vrot.lane.b32.xlu0 %v581, 84
  %v590 = vpop.permute.xlu0 %589
  %v591 = vsel %vm253, %v586, %v588
  %v592 = vsel %vm253, %v588, %v590
  %v596 = vsel %vm190, %v590, 0
  %598 = vmatpush.bf16.msra.mxu0 %v160
  %599 = vmatpush.bf16.msra.mxu0 %v159
  %600 = vmatpush.bf16.msra.mxu0 %v158
  %601 = vmatpush.bf16.msra.mxu0 %v157
  %602 = vmatpush.bf16.msra.mxu0 %v156
  %603 = vmatpush.bf16.msra.mxu0 %v155
  %604 = vmatpush.bf16.msra.mxu0 %v154
  %605 = vmatpush.bf16.msra.mxu0 %v153
  %606 = vmatmul.bf16.gmra.mxu0 %v591
  %v607 = vpop.f32.mrf.mxu0
  %v608 = vadd.f32 %v65, %v607
  %v609 = vpop.f32.mrf.mxu0
  %610 = vdwg.mxu0
  %611 = vmatpush.bf16.msra.mxu0 %v168
  %612 = vmatpush.bf16.msra.mxu0 %v167
  %613 = vmatpush.bf16.msra.mxu0 %v166
  %614 = vmatpush.bf16.msra.mxu0 %v165
  %615 = vmatpush.bf16.msra.mxu0 %v164
  %616 = vmatpush.bf16.msra.mxu0 %v163
  %617 = vmatpush.bf16.msra.mxu0 %v162
  %618 = vmatpush.bf16.msra.mxu0 %v161
  %619 = vmatmul.bf16.gmra.mxu0 %v592
  %v620 = vpop.f32.mrf.mxu0
  %v621 = vadd.f32 %v608, %v620
  %v622 = vpop.f32.mrf.mxu0
  %623 = vdwg.mxu0
  %624 = vmatpush.bf16.msra.mxu0 0
  %625 = vmatpush.bf16.msra.mxu0 0
  %626 = vmatpush.bf16.msra.mxu0 0
  %627 = vmatpush.bf16.msra.mxu0 0
  %628 = vmatpush.bf16.msra.mxu0 0
  %629 = vmatpush.bf16.msra.mxu0 %v196
  %630 = vmatpush.bf16.msra.mxu0 %v170
  %631 = vmatpush.bf16.msra.mxu0 %v169
  %632 = vmatmul.bf16.gmra.mxu0 %v596
  %v633 = vpop.f32.mrf.mxu0
  %v634 = vadd.f32 %v621, %v633
  %v635 = vpop.f32.mrf.mxu0
  %636 = vdwg.mxu0
  %v637 = vmax.f32 %v634, 0.0
  %v638 = vmax.f32 %v575, %v637
  %v639 = vld [vmem:[%s526 + $0x20] sm:$0xff]
  %v640 = vld [vmem:[%s526 + $0x28] sm:$0xff]
  %v641 = vld [vmem:[%s526 + $0x30] sm:$0xff]
  %v642 = vld [vmem:[%s526 + $0x38] sm:$0xff]
  %v643 = vpack.c.bf16 %v639, %v639
  %v644 = vpack.c.bf16 %v640, %v640
  %v645 = vpack.c.bf16 %v641, %v641
  %v646 = vpack.c.bf16 %v642, %v642
  %651 = vrot.lane.b32.xlu0 %v643, 40
  %v652 = vpop.permute.xlu0 %651
  %653 = vrot.lane.b32.xlu0 %v644, 40
  %v654 = vpop.permute.xlu0 %653
  %655 = vrot.lane.b32.xlu0 %v645, 40
  %v656 = vpop.permute.xlu0 %655
  %657 = vrot.lane.b32.xlu0 %v646, 40
  %v658 = vpop.permute.xlu0 %657
  %v659 = vsel %vm322, %v652, %v654
  %v660 = vsel %vm322, %v654, %v656
  %v661 = vsel %vm322, %v656, %v658
  %v665 = vsel %vm190, %v661, 0
  %667 = vmatpush.bf16.msra.mxu0 %v160
  %668 = vmatpush.bf16.msra.mxu0 %v159
  %669 = vmatpush.bf16.msra.mxu0 %v158
  %670 = vmatpush.bf16.msra.mxu0 %v157
  %671 = vmatpush.bf16.msra.mxu0 %v156
  %672 = vmatpush.bf16.msra.mxu0 %v155
  %673 = vmatpush.bf16.msra.mxu0 %v154
  %674 = vmatpush.bf16.msra.mxu0 %v153
  %675 = vmatmul.bf16.gmra.mxu0 %v659
  %v676 = vpop.f32.mrf.mxu0
  %v677 = vadd.f32 %v65, %v676
  %v678 = vpop.f32.mrf.mxu0
  %679 = vdwg.mxu0
  %680 = vmatpush.bf16.msra.mxu0 %v168
  %681 = vmatpush.bf16.msra.mxu0 %v167
  %682 = vmatpush.bf16.msra.mxu0 %v166
  %683 = vmatpush.bf16.msra.mxu0 %v165
  %684 = vmatpush.bf16.msra.mxu0 %v164
  %685 = vmatpush.bf16.msra.mxu0 %v163
  %686 = vmatpush.bf16.msra.mxu0 %v162
  %687 = vmatpush.bf16.msra.mxu0 %v161
  %688 = vmatmul.bf16.gmra.mxu0 %v660
  %v689 = vpop.f32.mrf.mxu0
  %v690 = vadd.f32 %v677, %v689
  %v691 = vpop.f32.mrf.mxu0
  %692 = vdwg.mxu0
  %693 = vmatpush.bf16.msra.mxu0 0
  %694 = vmatpush.bf16.msra.mxu0 0
  %695 = vmatpush.bf16.msra.mxu0 0
  %696 = vmatpush.bf16.msra.mxu0 0
  %697 = vmatpush.bf16.msra.mxu0 0
  %698 = vmatpush.bf16.msra.mxu0 %v196
  %699 = vmatpush.bf16.msra.mxu0 %v170
  %700 = vmatpush.bf16.msra.mxu0 %v169
  %701 = vmatmul.bf16.gmra.mxu0 %v665
  %v702 = vpop.f32.mrf.mxu0
  %v703 = vadd.f32 %v690, %v702
  %v704 = vpop.f32.mrf.mxu0
  %705 = vdwg.mxu0
  %v706 = vmax.f32 %v703, 0.0
  %v707 = vld [vmem:[%s526 + $0x38] sm:$0xff]
  %v708 = vld [vmem:[%s526 + $0x40] sm:$0xff]
  %v709 = vld [vmem:[%s526 + $0x48] sm:$0xff]
  %v710 = vpack.c.bf16 %v707, %v707
  %v711 = vpack.c.bf16 %v708, %v708
  %v712 = vpack.c.bf16 %v709, %v709
  %716 = vrot.lane.b32.xlu0 %v710, 124
  %v717 = vpop.permute.xlu0 %716
  %718 = vrot.lane.b32.xlu0 %v711, 124
  %v719 = vpop.permute.xlu0 %718
  %720 = vrot.lane.b32.xlu0 %v712, 124
  %v721 = vpop.permute.xlu0 %720
  %v722 = vsel %vm386, %v717, %v719
  %v723 = vsel %vm386, %v719, %v721
  %v727 = vsel %vm190, %v721, 0
  %729 = vmatpush.bf16.msra.mxu0 %v160
  %730 = vmatpush.bf16.msra.mxu0 %v159
  %731 = vmatpush.bf16.msra.mxu0 %v158
  %732 = vmatpush.bf16.msra.mxu0 %v157
  %733 = vmatpush.bf16.msra.mxu0 %v156
  %734 = vmatpush.bf16.msra.mxu0 %v155
  %735 = vmatpush.bf16.msra.mxu0 %v154
  %736 = vmatpush.bf16.msra.mxu0 %v153
  %737 = vmatmul.bf16.gmra.mxu0 %v722
  %v738 = vpop.f32.mrf.mxu0
  %v739 = vadd.f32 %v65, %v738
  %v740 = vpop.f32.mrf.mxu0
  %741 = vdwg.mxu0
  %742 = vmatpush.bf16.msra.mxu0 %v168
  %743 = vmatpush.bf16.msra.mxu0 %v167
  %744 = vmatpush.bf16.msra.mxu0 %v166
  %745 = vmatpush.bf16.msra.mxu0 %v165
  %746 = vmatpush.bf16.msra.mxu0 %v164
  %747 = vmatpush.bf16.msra.mxu0 %v163
  %748 = vmatpush.bf16.msra.mxu0 %v162
  %749 = vmatpush.bf16.msra.mxu0 %v161
  %750 = vmatmul.bf16.gmra.mxu0 %v723
  %v751 = vpop.f32.mrf.mxu0
  %v752 = vadd.f32 %v739, %v751
  %v753 = vpop.f32.mrf.mxu0
  %754 = vdwg.mxu0
  %755 = vmatpush.bf16.msra.mxu0 0
  %756 = vmatpush.bf16.msra.mxu0 0
  %757 = vmatpush.bf16.msra.mxu0 0
  %758 = vmatpush.bf16.msra.mxu0 0
  %759 = vmatpush.bf16.msra.mxu0 0
  %760 = vmatpush.bf16.msra.mxu0 %v196
  %761 = vmatpush.bf16.msra.mxu0 %v170
  %762 = vmatpush.bf16.msra.mxu0 %v169
  %763 = vmatmul.bf16.gmra.mxu0 %v727
  %v764 = vpop.f32.mrf.mxu0
  %v765 = vadd.f32 %v752, %v764
  %v766 = vpop.f32.mrf.mxu0
  %767 = vdwg.mxu0
  %v768 = vmax.f32 %v765, 0.0
  %v769 = vmax.f32 %v706, %v768
  %v770 = vpack.c.bf16 %v638, %v638
  %v772 = vsel %vm448, %v770, 0
  %774 = vmatpush.bf16.msra.mxu0 0
  %775 = vmatpush.bf16.msra.mxu0 0
  %776 = vmatpush.bf16.msra.mxu0 0
  %777 = vmatpush.bf16.msra.mxu0 0
  %778 = vmatpush.bf16.msra.mxu0 0
  %779 = vmatpush.bf16.msra.mxu0 0
  %780 = vmatpush.bf16.msra.mxu0 %v445
  %781 = vmatpush.bf16.msra.mxu0 %v444
  %782 = vmatmul.bf16.gmra.mxu0 %v772
  %v783 = vpop.f32.mrf.mxu0
  %v784 = vadd.f32 %v69, %v783
  %v785 = vpop.f32.mrf.mxu0
  %786 = vdwg.mxu0
  %v787 = vmax.f32 %v784, 0.0
  %v788 = vpack.c.bf16 %v769, %v769
  %v790 = vsel %vm448, %v788, 0
  %792 = vmatpush.bf16.msra.mxu0 0
  %793 = vmatpush.bf16.msra.mxu0 0
  %794 = vmatpush.bf16.msra.mxu0 0
  %795 = vmatpush.bf16.msra.mxu0 0
  %796 = vmatpush.bf16.msra.mxu0 0
  %797 = vmatpush.bf16.msra.mxu0 0
  %798 = vmatpush.bf16.msra.mxu0 %v445
  %799 = vmatpush.bf16.msra.mxu0 %v444
  %800 = vmatmul.bf16.gmra.mxu0 %v790
  %v801 = vpop.f32.mrf.mxu0
  %v802 = vadd.f32 %v69, %v801
  %v803 = vpop.f32.mrf.mxu0
  %804 = vdwg.mxu0
  %v805 = vmax.f32 %v802, 0.0
  %v806 = vmax.f32 %v787, %v805
  %807 = vxpose.xlu0.b32.start [1/16] %v806, 128
  %808 = vxpose.xlu0.b32.cont [2/16] 0.0, 128
  %809 = vxpose.xlu0.b32.cont [3/16] 0.0, 128
  %810 = vxpose.xlu0.b32.cont [4/16] 0.0, 128
  %811 = vxpose.xlu0.b32.cont [5/16] 0.0, 128
  %812 = vxpose.xlu0.b32.cont [6/16] 0.0, 128
  %813 = vxpose.xlu0.b32.cont [7/16] 0.0, 128
  %814 = vxpose.xlu0.b32.cont [8/16] 0.0, 128
  %815 = vxpose.xlu0.b32.cont [9/16] 0.0, 128
  %816 = vxpose.xlu0.b32.cont [10/16] 0.0, 128
  %817 = vxpose.xlu0.b32.cont [11/16] 0.0, 128
  %818 = vxpose.xlu0.b32.cont [12/16] 0.0, 128
  %819 = vxpose.xlu0.b32.cont [13/16] 0.0, 128
  %820 = vxpose.xlu0.b32.cont [14/16] 0.0, 128
  %821 = vxpose.xlu0.b32.cont [15/16] 0.0, 128
  %822 = vxpose.xlu0.b32.end [16/16] 0.0, 128
  %v823 = vpop.trf.xlu0
  %v824 = vpop.trf.xlu0
  %v825 = vpop.trf.xlu0
  %v826 = vpop.trf.xlu0
  %v827 = vpop.trf.xlu0
  %v828 = vpop.trf.xlu0
  %v829 = vpop.trf.xlu0
  %v830 = vpop.trf.xlu0
  %v831 = vpop.trf.xlu0
  %v832 = vpop.trf.xlu0
  %v833 = vpop.trf.xlu0
  %v834 = vpop.trf.xlu0
  %v835 = vpop.trf.xlu0
  %v836 = vpop.trf.xlu0
  %v837 = vpop.trf.xlu0
  %v838 = vpop.trf.xlu0
  %s839 = scalar_lea.vmem %s5, 64
  %840 = vst.msk [vmem:[%s839] sm:$0xff] %vm517, %v823
  %841 = vst.msk [vmem:[%s839 + $0x8] sm:$0xff] %vm517, %v824
  %842 = vst.msk [vmem:[%s839 + $0x10] sm:$0xff] %vm517, %v825
  %843 = vst.msk [vmem:[%s839 + $0x18] sm:$0xff] %vm517, %v826
  %844 = vst.msk [vmem:[%s839 + $0x20] sm:$0xff] %vm517, %v827
  %845 = vst.msk [vmem:[%s839 + $0x28] sm:$0xff] %vm517, %v828
  %846 = vst.msk [vmem:[%s839 + $0x30] sm:$0xff] %vm517, %v829
  %847 = vst.msk [vmem:[%s839 + $0x38] sm:$0xff] %vm517, %v830
  // Predicated region
  $region22: #{tpu_custom_call.1} parent=0 // pred_check
    _
  $region23: #{tpu_custom_call.1} parent=0 // pred_check_branch
    %849 = sbr.rel (0) target = $region25
  $region24: #{tpu_custom_call.1} parent=0 // pred_region
    _
  $region25: #{tpu_custom_call.1} parent=0 // pred_fallthru
    _
  // Predicated region
  $region26: #{tpu_custom_call.1} parent=0 // pred_check
    _
  $region27: #{tpu_custom_call.1} parent=0 // pred_check_branch
    %851 = sbr.rel (0) target = $region29
  $region28: #{tpu_custom_call.1} parent=0 // pred_region
    _
  $region29: #{tpu_custom_call.1} parent=0 // pred_fallthru
    _

</llo_original>
